<compile_context>
chip_gen: v7x
topology: tpu7x:2x2x1
jax: 0.10.0
libtpu: 0.0.40
codegen_flags: <defaults>
</compile_context>

<pallas_src>
import functools

import jax
import jax.numpy as jnp
from jax.experimental import pallas as pl
from jax.experimental.pallas import tpu as pltpu

# ---------------------------------------------------------------------------
# CV expert-ODE parameters (deterministic, in-script; CV_params in the repo)
# ---------------------------------------------------------------------------
CV_PARAMS = dict(
    r_tpr_mod=0.0,
    f_hr_max=3.0,
    f_hr_min=2.0 / 3.0,
    r_tpr_max=2.134,
    r_tpr_min=0.5335,
    sv_mod=0.001,
    ca=4.0,
    cv=111.0,
    k_width=0.1838,
    p_aset=70.0,
    tau=20.0,
)

_VMEM = pl.BlockSpec(memory_space=pltpu.MemorySpace.VMEM)
_SMEM = pl.BlockSpec(memory_space=pltpu.MemorySpace.SMEM)


def _round_up(x, m):
    return ((x + m - 1) // m) * m


# ---------------------------------------------------------------------------
# Pallas kernel 0: treatment MLP u(t) for ALL time steps at once (hoisted out
# of the SDE hot loop -- u(t) is identical for every row at a given step).
# ---------------------------------------------------------------------------
def treatment_mlp_kernel(t_ref, w_in, b_in, w_h, b_h, w_out, b_out, out_ref, *, depth):
    h = jnp.maximum(
        jnp.dot(t_ref[...], w_in[...], preferred_element_type=jnp.float32) + b_in[...], 0.0)
    for i in range(depth):
        h = jnp.maximum(
            jnp.dot(h, w_h[i], preferred_element_type=jnp.float32) + b_h[i:i + 1, :], 0.0)
    out_ref[...] = jnp.dot(h, w_out[...], preferred_element_type=jnp.float32) + b_out[...]


def _treatment_call(t_col, p, *, depth):
    n_steps = t_col.shape[0]
    u_dim = p["wt_out"].shape[1]
    kernel = functools.partial(treatment_mlp_kernel, depth=depth)
    return pl.pallas_call(
        kernel,
        out_shape=jax.ShapeDtypeStruct((n_steps, u_dim), jnp.float32),
        in_specs=[_VMEM] * 7,
        out_specs=_VMEM,
    )(t_col, p["wt_in"], p["bt_in"], p["wt_h"], p["bt_h"], p["wt_out"], p["bt_out"])


# ---------------------------------------------------------------------------
# Pallas kernel 1: FUSED Euler-Maruyama integration of the augmented latent SDE
# (one pallas_call; grid axis = time steps; state carried in VMEM scratch)
# ---------------------------------------------------------------------------
def fused_sde_kernel(dt_ref, u_ref, dw_ref, y0_ref,
                     wdy_ref, wdu_ref, bdi_ref, wdh_ref, bdh_ref, wdo_ref, bdo_ref,
                     out_ref, y_scr,
                     *, latent_dim, depth, theta, mu, sigma):
    step = pl.program_id(0)

    @pl.when(step == 0)
    def _():
        y_scr[...] = y0_ref[...]

    dt = dt_ref[step]                                   # scalar from SMEM table

    y_aug = y_scr[...]                                  # (N, latent_dim + 2)
    y = y_aug[:, :latent_dim]                           # core latent state
    logqp = y_aug[:, latent_dim:latent_dim + 1]         # logqp column
    T = y_aug[:, latent_dim + 1:latent_dim + 2]         # treatment indicator

    # treatment effect: u(t) precomputed per step, broadcast over rows
    u_t = u_ref[...] * T                                # (1,u_dim)*(N,1) -> (N,u_dim)

    # sde_drift: MLPSimple(latent+u_dim -> 4*latent -> ... -> latent)
    # input layer (Linear+ReLU) with split weights -> no [y, u_t] concat
    hd = jnp.maximum(
        jnp.dot(y, wdy_ref[...], preferred_element_type=jnp.float32)
        + jnp.dot(u_t, wdu_ref[...], preferred_element_type=jnp.float32)
        + bdi_ref[...], 0.0)
    for k in range(depth):                              # hidden layers: Linear + Tanh
        hd = jnp.tanh(
            jnp.dot(hd, wdh_ref[k], preferred_element_type=jnp.float32)
            + bdh_ref[k:k + 1, :])
    drift_nn = jnp.dot(hd, wdo_ref[...], preferred_element_type=jnp.float32) + bdo_ref[...]

    # f, h and the logqp augmentation (as in LatentSDE.f_aug)
    h_ou = theta * (mu - y)                             # OU prior drift
    f = drift_nn - h_ou                                 # posterior drift (spec-exact)
    u_div = (f - h_ou) / sigma                          # _stable_division with const g
    f_logqp = 0.5 * jnp.sum(u_div * u_div, axis=1, keepdims=True)

    # Euler-Maruyama update, written as direct column slices (no concats,
    # no zero-diffusion columns): Tx column is left untouched in scratch.
    y_scr[:, :latent_dim] = y + f * dt + sigma * dw_ref[...]
    y_scr[:, latent_dim:latent_dim + 1] = logqp + f_logqp * dt
    out_ref[...] = y_scr[...]


def _fused_sde_call(dts, u_all, dW, y0, p, *, latent_dim, depth, theta, mu, sigma):
    n_steps = dts.shape[0]
    n_pad, dim_aug = y0.shape
    hidden = p["bd_in"].shape[1]
    u_dim = p["wd_in_u"].shape[0]

    kernel = functools.partial(fused_sde_kernel, latent_dim=latent_dim, depth=depth,
                               theta=theta, mu=mu, sigma=sigma)
    const2 = lambda i: (0, 0)
    const3 = lambda i: (0, 0, 0)

    in_specs = [
        _SMEM,                                                        # dts table
        pl.BlockSpec((None, 1, u_dim), lambda i: (i, 0, 0)),          # u(t) per step
        pl.BlockSpec((None, n_pad, latent_dim), lambda i: (i, 0, 0)), # dW per step
        pl.BlockSpec((n_pad, dim_aug), const2),                       # y0 (resident)
        pl.BlockSpec((latent_dim, hidden), const2),                   # wd_in_y
        pl.BlockSpec((u_dim, hidden), const2),                        # wd_in_u
        pl.BlockSpec((1, hidden), const2),                            # bd_in
        pl.BlockSpec((depth, hidden, hidden), const3),                # wd_h
        pl.BlockSpec((depth, hidden), const2),                        # bd_h
        pl.BlockSpec((hidden, latent_dim), const2),                   # wd_out
        pl.BlockSpec((1, latent_dim), const2),                        # bd_out
    ]
    return pl.pallas_call(
        kernel,
        out_shape=jax.ShapeDtypeStruct((n_steps, n_pad, dim_aug), jnp.float32),
        grid=(n_steps,),
        in_specs=in_specs,
        out_specs=pl.BlockSpec((None, n_pad, dim_aug), lambda i: (i, 0, 0)),
        scratch_shapes=[pltpu.VMEM((n_pad, dim_aug), jnp.float32)],
        compiler_params=pltpu.CompilerParams(dimension_semantics=("arbitrary",)),
    )(dts, u_all, dW, y0,
      p["wd_in_y"], p["wd_in_u"], p["bd_in"], p["wd_h"], p["bd_h"],
      p["wd_out"], p["bd_out"])


# ---------------------------------------------------------------------------
# Pallas kernel 2: FUSED RK4 integration of the augmented CV expert ODE
# (one pallas_call; grid axis = time steps; state carried in VMEM scratch)
# ---------------------------------------------------------------------------
def fused_expert_kernel(t_ref, dt_ref, y0_ref, out_ref, y_scr, *, cvp):
    step = pl.program_id(0)

    @pl.when(step == 0)
    def _():
        y_scr[...] = y0_ref[...]

    t = t_ref[step]
    dt = dt_ref[step]

    y = y_scr[...]                                      # (B, 5)
    cols = tuple(y[:, j:j + 1] for j in range(5))       # p_a, p_v, s, sv, Tx

    f_hr_rng = cvp["f_hr_max"] - cvp["f_hr_min"]
    r_tpr_rng = cvp["r_tpr_max"] - cvp["r_tpr_min"]

    def deriv(c, tt):
        p_a, p_v, s, sv, tx = c
        i_ext = 5.0 * jnp.exp(-((tt - 5.0) / 5.0) ** 2) * tx
        f_hr = s * f_hr_rng + cvp["f_hr_min"]
        r_tpr = s * r_tpr_rng + cvp["r_tpr_min"] - cvp["r_tpr_mod"]
        dva = -1.0 * (p_a - p_v) / r_tpr + sv * f_hr
        dvv = -1.0 * dva + i_ext
        dpa = dva / (cvp["ca"] * 100.0)
        dpv = dvv / (cvp["cv"] * 10.0)
        sig = 1.0 / (1.0 + jnp.exp(-(cvp["k_width"] * (p_a - cvp["p_aset"]))))
        ds = (1.0 - sig - s) / cvp["tau"]
        dsv = i_ext * cvp["sv_mod"]
        return (dpa, dpv, ds, dsv, jnp.zeros_like(dpa))

    def axpy(c, d, a):
        return tuple(ci + a * di for ci, di in zip(c, d))

    k1 = deriv(cols, t)
    k2 = deriv(axpy(cols, k1, 0.5 * dt), t + 0.5 * dt)
    k3 = deriv(axpy(cols, k2, 0.5 * dt), t + 0.5 * dt)
    k4 = deriv(axpy(cols, k3, dt), t + dt)

    for j in range(5):                                  # column-wise, concat-free stores
        y_scr[:, j:j + 1] = cols[j] + (dt / 6.0) * (k1[j] + 2.0 * k2[j] + 2.0 * k3[j] + k4[j])
    out_ref[...] = y_scr[...]


def _fused_expert_call(ts, dts, y0, cvp):
    n_steps = ts.shape[0]
    b_pad, d = y0.shape
    kernel = functools.partial(fused_expert_kernel, cvp=cvp)
    return pl.pallas_call(
        kernel,
        out_shape=jax.ShapeDtypeStruct((n_steps, b_pad, d), jnp.float32),
        grid=(n_steps,),
        in_specs=[_SMEM, _SMEM, pl.BlockSpec((b_pad, d), lambda i: (0, 0))],
        out_specs=pl.BlockSpec((None, b_pad, d), lambda i: (i, 0, 0)),
        scratch_shapes=[pltpu.VMEM((b_pad, d), jnp.float32)],
        compiler_params=pltpu.CompilerParams(dimension_semantics=("arbitrary",)),
    )(ts, dts, y0)


# ---------------------------------------------------------------------------
# Parameter initialization (deterministic, synthetic)
# ---------------------------------------------------------------------------
def _init_mlp(key, in_dim, out_dim, hidden, depth, scale=0.1):
    ks = jax.random.split(key, 6)
    return dict(
        w_in=scale * jax.random.normal(ks[0], (in_dim, hidden), jnp.float32),
        b_in=scale * jax.random.normal(ks[1], (1, hidden), jnp.float32),
        w_h=scale * jax.random.normal(ks[2], (depth, hidden, hidden), jnp.float32),
        b_h=scale * jax.random.normal(ks[3], (depth, hidden), jnp.float32),
        w_out=scale * jax.random.normal(ks[4], (hidden, out_dim), jnp.float32),
        b_out=scale * jax.random.normal(ks[5], (1, out_dim), jnp.float32),
    )


# ---------------------------------------------------------------------------
# The module
# ---------------------------------------------------------------------------
class NeuralExpertSDEIntegrator:
    DEPTH = 4

    def __init__(self, latent_dim, hidden_dim, num_samples, Tx_dim,
                 theta, mu, sigma, expert_ODE_size, key):
        self.latent_dim = latent_dim
        self.hidden_dim = hidden_dim
        self.num_samples = num_samples
        self.Tx_dim = Tx_dim
        self.theta = float(theta)
        self.mu = float(mu)
        self.sigma = float(sigma)
        self.expert_ODE_size = expert_ODE_size

        u_dim = latent_dim // 5
        self.u_dim = u_dim
        k_treat, k_drift = jax.random.split(key)
        mt = _init_mlp(k_treat, 1, u_dim, 20, self.DEPTH)
        md = _init_mlp(k_drift, latent_dim + u_dim, latent_dim, 4 * latent_dim, self.DEPTH)
        self.params = dict(
            wt_in=mt["w_in"], bt_in=mt["b_in"], wt_h=mt["w_h"], bt_h=mt["b_h"],
            wt_out=mt["w_out"], bt_out=mt["b_out"],
            # drift input weight is split so the kernel never concatenates [y, u_t]
            wd_in_y=md["w_in"][:latent_dim, :], wd_in_u=md["w_in"][latent_dim:, :],
            bd_in=md["b_in"], wd_h=md["w_h"], bd_h=md["b_h"],
            wd_out=md["w_out"], bd_out=md["b_out"],
        )

    # -- expert CV ODE path --------------------------------------------------
    def forward_expert(self, z_expt, t, Tx):
        aug_init = jnp.concatenate(
            [z_expt, Tx[:, None].astype(z_expt.dtype)], axis=-1).astype(jnp.float32)
        b, d = aug_init.shape
        b_pad = _round_up(b, 8)
        y0 = jnp.zeros((b_pad, d), jnp.float32).at[:b].set(aug_init)

        ts = t[:-1]
        dts = t[1:] - t[:-1]
        ys = _fused_expert_call(ts, dts, y0, CV_PARAMS)            # (T-1, b_pad, 5)
        ys = ys[:, :b, :]

        traj = jnp.concatenate([aug_init[None], ys], axis=0)       # (T, B, 5)
        traj = jnp.transpose(traj, (1, 0, 2))                      # (B, T, 5)
        return traj[:, :, :-self.Tx_dim]                           # drop Tx aug

    # -- latent SDE path ------------------------------------------------------
    def forward_SDE(self, z_SDE, t, Tx, key):
        batch_size = z_SDE.shape[0]
        s = self.num_samples
        tx_rep = jnp.broadcast_to(Tx[:, None, None].astype(z_SDE.dtype), (batch_size, s, 1))
        aug_y0 = jnp.concatenate(
            [z_SDE, jnp.zeros((batch_size, s, 1), z_SDE.dtype), tx_rep], axis=-1)
        dim_aug = aug_y0.shape[-1]
        aug_y0 = aug_y0.reshape(-1, dim_aug).astype(jnp.float32)   # (B*S, dim_aug)
        n = aug_y0.shape[0]
        n_pad = _round_up(n, 8)
        y0 = jnp.zeros((n_pad, dim_aug), jnp.float32).at[:n].set(aug_y0)

        t_len = t.shape[0]
        ts = t[:-1]
        dts = t[1:] - t[:-1]
        # diffusion only acts on latent columns -> latent-dim noise only
        dW = jax.random.normal(key, (t_len - 1, n_pad, self.latent_dim), jnp.float32) \
            * jnp.sqrt(dts)[:, None, None]
        # hoist the treatment MLP out of the time loop: u(t_i) for all steps at once
        u_all = _treatment_call(ts.reshape(-1, 1).astype(jnp.float32), self.params,
                                depth=self.DEPTH)                  # (T-1, u_dim)
        u_all = u_all.reshape(t_len - 1, 1, self.u_dim)

        ys = _fused_sde_call(dts.astype(jnp.float32), u_all, dW, y0, self.params,
                             latent_dim=self.latent_dim, depth=self.DEPTH,
                             theta=self.theta, mu=self.mu, sigma=self.sigma)
        ys = ys[:, :n, :]                                          # (T-1, N, dim_aug)

        aug_ys = jnp.concatenate([aug_y0[None], ys], axis=0)       # (T, N, dim_aug)
        # reproduce the torch reshape(-1, num_samples, len(t), dim_aug) exactly
        aug_ys = aug_ys.reshape(-1, s, t_len, dim_aug)
        ys_out = aug_ys[:, :, :, :-2]
        logqp_path = aug_ys[:, :, -1, -2]
        logqp = 0 + logqp_path
        return ys_out, logqp

    # -- full forward ---------------------------------------------------------
    def forward(self, z_expt, z_SDE, t, Tx, latent_type, key):
        t = t[0] if t.ndim > 1 else t
        t = t.reshape(-1).astype(jnp.float32)
        if latent_type == "expert":
            assert z_expt.shape[1] == self.expert_ODE_size
            return self.forward_expert(z_expt, t, Tx)
        elif latent_type == "SDE":
            assert z_SDE.shape[2] == self.latent_dim
            return self.forward_SDE(z_SDE, t, Tx, key)
        elif latent_type == "hybrid_SDE":
            assert z_expt.shape[1] + z_SDE.shape[2] == self.expert_ODE_size + self.latent_dim
            traj_expert = self.forward_expert(z_expt, t, Tx)
            traj_sde, logqp_sde = self.forward_SDE(z_SDE, t, Tx, key)
            return traj_expert, traj_sde, logqp_sde


# ---------------------------------------------------------------------------
if __name__ == "__main__":
    key = jax.random.PRNGKey(0)
    k_model, k_zexpt, k_zsde, k_tx, k_noise = jax.random.split(key, 5)

    batch = 2
    latent_dim = 10          # -> u_dim = 2, drift hidden = 40
    hidden_dim = 32
    num_samples = 3
    Tx_dim = 1
    theta, mu, sigma = 0.1, 0.5, 0.2
    expert_ODE_size = 4
    t_len = 8

    model = NeuralExpertSDEIntegrator(latent_dim, hidden_dim, num_samples, Tx_dim,
                                      theta, mu, sigma, expert_ODE_size, k_model)

    # inputs
    z_expt = jnp.abs(jax.random.normal(k_zexpt, (batch, expert_ODE_size), jnp.float32)) \
        * jnp.array([80.0, 30.0, 0.5, 0.05], jnp.float32)        # physiological-ish scales
    z_SDE = jax.random.normal(k_zsde, (batch, num_samples, latent_dim), jnp.float32)
    Tx = (jax.random.uniform(k_tx, (batch,)) > 0.5).astype(jnp.float32)
    t = jnp.linspace(0.0, 1.0, t_len, dtype=jnp.float32)

    traj_expert, traj_sde, logqp = model.forward(
        z_expt, z_SDE, t, Tx, latent_type="hybrid_SDE", key=k_noise)

    jax.block_until_ready((traj_expert, traj_sde, logqp))

    assert traj_expert.shape == (batch, t_len, expert_ODE_size)
    assert traj_sde.shape == (batch, num_samples, t_len, latent_dim)
    assert logqp.shape == (batch, num_samples)
    assert jnp.all(jnp.isfinite(traj_expert))
    assert jnp.all(jnp.isfinite(traj_sde))
    assert jnp.all(jnp.isfinite(logqp))

    print("KERNEL_OK")
</pallas_src>

<mosaic_0001>
module attributes {stable_mosaic.version = 11 : i64} {
  func.func @fused_expert_kernel(%arg0: i32, %arg1: memref<7xf32, #tpu.memory_space<smem>>, %arg2: memref<7xf32, #tpu.memory_space<smem>>, %arg3: memref<8x5xf32, #tpu.memory_space<vmem>>, %arg4: memref<1x8x5xf32, #tpu.memory_space<vmem>>, %arg5: memref<8x5xf32, #tpu.memory_space<vmem>>) attributes {dimension_semantics = [#tpu.dimension_semantics<arbitrary>], iteration_bounds = array<i64: 7>, scalar_prefetch = 0 : i64, scratch_operands = 1 : i64, tpu.core_type = #tpu.core_type<tc>, window_params = [{transform_indices = @transform_0, window_bounds = array<i64: 7>}, {transform_indices = @transform_1, window_bounds = array<i64: 7>}, {pipeline_mode = #tpu.pipeline_mode<synchronous>, transform_indices = @transform_2, window_bounds = array<i64: 8, 5>}, {transform_indices = @transform_3, window_bounds = array<i64: 1, 8, 5>}]} {
    %c0_i32 = arith.constant 0 : i32
    %0 = arith.cmpi eq, %arg0, %c0_i32 : i32
    %1 = arith.extui %0 : i1 to i32
    %c0_i32_0 = arith.constant 0 : i32
    %2 = arith.cmpi ne, %1, %c0_i32_0 : i32
    scf.if %2 {
      %c0_119 = arith.constant 0 : index
      %c0_120 = arith.constant 0 : index
      %329 = vector.load %arg3[%c0_119, %c0_120] : memref<8x5xf32, #tpu.memory_space<vmem>>, vector<8x5xf32>
      %c0_121 = arith.constant 0 : index
      %c0_122 = arith.constant 0 : index
      %330 = vector.load %arg5[%c0_121, %c0_122] : memref<8x5xf32, #tpu.memory_space<vmem>>, vector<8x5xf32>
      tpu.vector_store %arg5[%c0_121, %c0_122], %329 {strides = array<i32>} : memref<8x5xf32, #tpu.memory_space<vmem>>, vector<8x5xf32>,
    } else {
    }
    %3 = arith.index_cast %arg0 : i32 to index
    %4 = memref.load %arg1[%3] : memref<7xf32, #tpu.memory_space<smem>>
    %5 = arith.index_cast %arg0 : i32 to index
    %6 = memref.load %arg2[%5] : memref<7xf32, #tpu.memory_space<smem>>
    %c0 = arith.constant 0 : index
    %c0_1 = arith.constant 0 : index
    %7 = vector.load %arg5[%c0, %c0_1] : memref<8x5xf32, #tpu.memory_space<vmem>>, vector<8x5xf32>
    %8 = vector.extract_strided_slice %7 {offsets = [0, 0], sizes = [8, 1], strides = [1, 1]} : vector<8x5xf32> to vector<8x1xf32>
    %9 = vector.extract_strided_slice %7 {offsets = [0, 1], sizes = [8, 1], strides = [1, 1]} : vector<8x5xf32> to vector<8x1xf32>
    %10 = vector.extract_strided_slice %7 {offsets = [0, 2], sizes = [8, 1], strides = [1, 1]} : vector<8x5xf32> to vector<8x1xf32>
    %11 = vector.extract_strided_slice %7 {offsets = [0, 3], sizes = [8, 1], strides = [1, 1]} : vector<8x5xf32> to vector<8x1xf32>
    %12 = vector.extract_strided_slice %7 {offsets = [0, 4], sizes = [8, 1], strides = [1, 1]} : vector<8x5xf32> to vector<8x1xf32>
    %cst = arith.constant 5.000000e+00 : f32
    %13 = arith.subf %4, %cst : f32
    %cst_2 = arith.constant 5.000000e+00 : f32
    %14 = arith.divf %13, %cst_2 : f32
    %15 = arith.mulf %14, %14 : f32
    %cst_3 = arith.constant 0.000000e+00 : f32
    %16 = arith.subf %cst_3, %15 : f32
    %17 = math.exp %16 : f32
    %cst_4 = arith.constant 5.000000e+00 : f32
    %18 = arith.mulf %cst_4, %17 : f32
    %19 = vector.broadcast %18 : f32 to vector<8x1xf32>
    %20 = arith.mulf %19, %12 : vector<8x1xf32>
    %cst_5 = arith.constant 2.33333325 : f32
    %21 = vector.broadcast %cst_5 : f32 to vector<8x1xf32>
    %22 = arith.mulf %10, %21 : vector<8x1xf32>
    %cst_6 = arith.constant 0.666666686 : f32
    %23 = vector.broadcast %cst_6 : f32 to vector<8x1xf32>
    %24 = arith.addf %22, %23 : vector<8x1xf32>
    %cst_7 = arith.constant 1.600500e+00 : f32
    %25 = vector.broadcast %cst_7 : f32 to vector<8x1xf32>
    %26 = arith.mulf %10, %25 : vector<8x1xf32>
    %cst_8 = arith.constant 5.335000e-01 : f32
    %27 = vector.broadcast %cst_8 : f32 to vector<8x1xf32>
    %28 = arith.addf %26, %27 : vector<8x1xf32>
    %cst_9 = arith.constant 0.000000e+00 : f32
    %29 = vector.broadcast %cst_9 : f32 to vector<8x1xf32>
    %30 = arith.subf %28, %29 : vector<8x1xf32>
    %31 = arith.subf %8, %9 : vector<8x1xf32>
    %cst_10 = arith.constant -1.000000e+00 : f32
    %32 = vector.broadcast %cst_10 : f32 to vector<8x1xf32>
    %33 = arith.mulf %32, %31 : vector<8x1xf32>
    %34 = arith.divf %33, %30 : vector<8x1xf32>
    %35 = arith.mulf %11, %24 : vector<8x1xf32>
    %36 = arith.addf %34, %35 : vector<8x1xf32>
    %cst_11 = arith.constant -1.000000e+00 : f32
    %37 = vector.broadcast %cst_11 : f32 to vector<8x1xf32>
    %38 = arith.mulf %37, %36 : vector<8x1xf32>
    %39 = arith.addf %38, %20 : vector<8x1xf32>
    %cst_12 = arith.constant 4.000000e+02 : f32
    %40 = vector.broadcast %cst_12 : f32 to vector<8x1xf32>
    %41 = arith.divf %36, %40 : vector<8x1xf32>
    %cst_13 = arith.constant 1.110000e+03 : f32
    %42 = vector.broadcast %cst_13 : f32 to vector<8x1xf32>
    %43 = arith.divf %39, %42 : vector<8x1xf32>
    %cst_14 = arith.constant 7.000000e+01 : f32
    %44 = vector.broadcast %cst_14 : f32 to vector<8x1xf32>
    %45 = arith.subf %8, %44 : vector<8x1xf32>
    %cst_15 = arith.constant 1.838000e-01 : f32
    %46 = vector.broadcast %cst_15 : f32 to vector<8x1xf32>
    %47 = arith.mulf %46, %45 : vector<8x1xf32>
    %cst_16 = arith.constant 0.000000e+00 : f32
    %48 = vector.broadcast %cst_16 : f32 to vector<8x1xf32>
    %49 = arith.subf %48, %47 : vector<8x1xf32>
    %50 = math.exp %49 : vector<8x1xf32>
    %cst_17 = arith.constant 1.000000e+00 : f32
    %51 = vector.broadcast %cst_17 : f32 to vector<8x1xf32>
    %52 = arith.addf %51, %50 : vector<8x1xf32>
    %cst_18 = arith.constant 1.000000e+00 : f32
    %53 = vector.broadcast %cst_18 : f32 to vector<8x1xf32>
    %54 = arith.divf %53, %52 : vector<8x1xf32>
    %cst_19 = arith.constant 1.000000e+00 : f32
    %55 = vector.broadcast %cst_19 : f32 to vector<8x1xf32>
    %56 = arith.subf %55, %54 : vector<8x1xf32>
    %57 = arith.subf %56, %10 : vector<8x1xf32>
    %cst_20 = arith.constant 2.000000e+01 : f32
    %58 = vector.broadcast %cst_20 : f32 to vector<8x1xf32>
    %59 = arith.divf %57, %58 : vector<8x1xf32>
    %cst_21 = arith.constant 1.000000e-03 : f32
    %60 = vector.broadcast %cst_21 : f32 to vector<8x1xf32>
    %61 = arith.mulf %20, %60 : vector<8x1xf32>
    %cst_22 = arith.constant 0.000000e+00 : f32
    %62 = vector.broadcast %cst_22 : f32 to vector<8x1xf32>
    %cst_23 = arith.constant 5.000000e-01 : f32
    %63 = arith.mulf %cst_23, %6 : f32
    %64 = vector.broadcast %63 : f32 to vector<8x1xf32>
    %65 = arith.mulf %64, %41 : vector<8x1xf32>
    %66 = arith.addf %8, %65 : vector<8x1xf32>
    %67 = vector.broadcast %63 : f32 to vector<8x1xf32>
    %68 = arith.mulf %67, %43 : vector<8x1xf32>
    %69 = arith.addf %9, %68 : vector<8x1xf32>
    %70 = vector.broadcast %63 : f32 to vector<8x1xf32>
    %71 = arith.mulf %70, %59 : vector<8x1xf32>
    %72 = arith.addf %10, %71 : vector<8x1xf32>
    %73 = vector.broadcast %63 : f32 to vector<8x1xf32>
    %74 = arith.mulf %73, %61 : vector<8x1xf32>
    %75 = arith.addf %11, %74 : vector<8x1xf32>
    %76 = vector.broadcast %63 : f32 to vector<8x1xf32>
    %77 = arith.mulf %76, %62 : vector<8x1xf32>
    %78 = arith.addf %12, %77 : vector<8x1xf32>
    %cst_24 = arith.constant 5.000000e-01 : f32
    %79 = arith.mulf %cst_24, %6 : f32
    %80 = arith.addf %4, %79 : f32
    %cst_25 = arith.constant 5.000000e+00 : f32
    %81 = arith.subf %80, %cst_25 : f32
    %cst_26 = arith.constant 5.000000e+00 : f32
    %82 = arith.divf %81, %cst_26 : f32
    %83 = arith.mulf %82, %82 : f32
    %cst_27 = arith.constant 0.000000e+00 : f32
    %84 = arith.subf %cst_27, %83 : f32
    %85 = math.exp %84 : f32
    %cst_28 = arith.constant 5.000000e+00 : f32
    %86 = arith.mulf %cst_28, %85 : f32
    %87 = vector.broadcast %86 : f32 to vector<8x1xf32>
    %88 = arith.mulf %87, %78 : vector<8x1xf32>
    %cst_29 = arith.constant 2.33333325 : f32
    %89 = vector.broadcast %cst_29 : f32 to vector<8x1xf32>
    %90 = arith.mulf %72, %89 : vector<8x1xf32>
    %cst_30 = arith.constant 0.666666686 : f32
    %91 = vector.broadcast %cst_30 : f32 to vector<8x1xf32>
    %92 = arith.addf %90, %91 : vector<8x1xf32>
    %cst_31 = arith.constant 1.600500e+00 : f32
    %93 = vector.broadcast %cst_31 : f32 to vector<8x1xf32>
    %94 = arith.mulf %72, %93 : vector<8x1xf32>
    %cst_32 = arith.constant 5.335000e-01 : f32
    %95 = vector.broadcast %cst_32 : f32 to vector<8x1xf32>
    %96 = arith.addf %94, %95 : vector<8x1xf32>
    %cst_33 = arith.constant 0.000000e+00 : f32
    %97 = vector.broadcast %cst_33 : f32 to vector<8x1xf32>
    %98 = arith.subf %96, %97 : vector<8x1xf32>
    %99 = arith.subf %66, %69 : vector<8x1xf32>
    %cst_34 = arith.constant -1.000000e+00 : f32
    %100 = vector.broadcast %cst_34 : f32 to vector<8x1xf32>
    %101 = arith.mulf %100, %99 : vector<8x1xf32>
    %102 = arith.divf %101, %98 : vector<8x1xf32>
    %103 = arith.mulf %75, %92 : vector<8x1xf32>
    %104 = arith.addf %102, %103 : vector<8x1xf32>
    %cst_35 = arith.constant -1.000000e+00 : f32
    %105 = vector.broadcast %cst_35 : f32 to vector<8x1xf32>
    %106 = arith.mulf %105, %104 : vector<8x1xf32>
    %107 = arith.addf %106, %88 : vector<8x1xf32>
    %cst_36 = arith.constant 4.000000e+02 : f32
    %108 = vector.broadcast %cst_36 : f32 to vector<8x1xf32>
    %109 = arith.divf %104, %108 : vector<8x1xf32>
    %cst_37 = arith.constant 1.110000e+03 : f32
    %110 = vector.broadcast %cst_37 : f32 to vector<8x1xf32>
    %111 = arith.divf %107, %110 : vector<8x1xf32>
    %cst_38 = arith.constant 7.000000e+01 : f32
    %112 = vector.broadcast %cst_38 : f32 to vector<8x1xf32>
    %113 = arith.subf %66, %112 : vector<8x1xf32>
    %cst_39 = arith.constant 1.838000e-01 : f32
    %114 = vector.broadcast %cst_39 : f32 to vector<8x1xf32>
    %115 = arith.mulf %114, %113 : vector<8x1xf32>
    %cst_40 = arith.constant 0.000000e+00 : f32
    %116 = vector.broadcast %cst_40 : f32 to vector<8x1xf32>
    %117 = arith.subf %116, %115 : vector<8x1xf32>
    %118 = math.exp %117 : vector<8x1xf32>
    %cst_41 = arith.constant 1.000000e+00 : f32
    %119 = vector.broadcast %cst_41 : f32 to vector<8x1xf32>
    %120 = arith.addf %119, %118 : vector<8x1xf32>
    %cst_42 = arith.constant 1.000000e+00 : f32
    %121 = vector.broadcast %cst_42 : f32 to vector<8x1xf32>
    %122 = arith.divf %121, %120 : vector<8x1xf32>
    %cst_43 = arith.constant 1.000000e+00 : f32
    %123 = vector.broadcast %cst_43 : f32 to vector<8x1xf32>
    %124 = arith.subf %123, %122 : vector<8x1xf32>
    %125 = arith.subf %124, %72 : vector<8x1xf32>
    %cst_44 = arith.constant 2.000000e+01 : f32
    %126 = vector.broadcast %cst_44 : f32 to vector<8x1xf32>
    %127 = arith.divf %125, %126 : vector<8x1xf32>
    %cst_45 = arith.constant 1.000000e-03 : f32
    %128 = vector.broadcast %cst_45 : f32 to vector<8x1xf32>
    %129 = arith.mulf %88, %128 : vector<8x1xf32>
    %cst_46 = arith.constant 0.000000e+00 : f32
    %130 = vector.broadcast %cst_46 : f32 to vector<8x1xf32>
    %cst_47 = arith.constant 5.000000e-01 : f32
    %131 = arith.mulf %cst_47, %6 : f32
    %132 = vector.broadcast %131 : f32 to vector<8x1xf32>
    %133 = arith.mulf %132, %109 : vector<8x1xf32>
    %134 = arith.addf %8, %133 : vector<8x1xf32>
    %135 = vector.broadcast %131 : f32 to vector<8x1xf32>
    %136 = arith.mulf %135, %111 : vector<8x1xf32>
    %137 = arith.addf %9, %136 : vector<8x1xf32>
    %138 = vector.broadcast %131 : f32 to vector<8x1xf32>
    %139 = arith.mulf %138, %127 : vector<8x1xf32>
    %140 = arith.addf %10, %139 : vector<8x1xf32>
    %141 = vector.broadcast %131 : f32 to vector<8x1xf32>
    %142 = arith.mulf %141, %129 : vector<8x1xf32>
    %143 = arith.addf %11, %142 : vector<8x1xf32>
    %144 = vector.broadcast %131 : f32 to vector<8x1xf32>
    %145 = arith.mulf %144, %130 : vector<8x1xf32>
    %146 = arith.addf %12, %145 : vector<8x1xf32>
    %cst_48 = arith.constant 5.000000e-01 : f32
    %147 = arith.mulf %cst_48, %6 : f32
    %148 = arith.addf %4, %147 : f32
    %cst_49 = arith.constant 5.000000e+00 : f32
    %149 = arith.subf %148, %cst_49 : f32
    %cst_50 = arith.constant 5.000000e+00 : f32
    %150 = arith.divf %149, %cst_50 : f32
    %151 = arith.mulf %150, %150 : f32
    %cst_51 = arith.constant 0.000000e+00 : f32
    %152 = arith.subf %cst_51, %151 : f32
    %153 = math.exp %152 : f32
    %cst_52 = arith.constant 5.000000e+00 : f32
    %154 = arith.mulf %cst_52, %153 : f32
    %155 = vector.broadcast %154 : f32 to vector<8x1xf32>
    %156 = arith.mulf %155, %146 : vector<8x1xf32>
    %cst_53 = arith.constant 2.33333325 : f32
    %157 = vector.broadcast %cst_53 : f32 to vector<8x1xf32>
    %158 = arith.mulf %140, %157 : vector<8x1xf32>
    %cst_54 = arith.constant 0.666666686 : f32
    %159 = vector.broadcast %cst_54 : f32 to vector<8x1xf32>
    %160 = arith.addf %158, %159 : vector<8x1xf32>
    %cst_55 = arith.constant 1.600500e+00 : f32
    %161 = vector.broadcast %cst_55 : f32 to vector<8x1xf32>
    %162 = arith.mulf %140, %161 : vector<8x1xf32>
    %cst_56 = arith.constant 5.335000e-01 : f32
    %163 = vector.broadcast %cst_56 : f32 to vector<8x1xf32>
    %164 = arith.addf %162, %163 : vector<8x1xf32>
    %cst_57 = arith.constant 0.000000e+00 : f32
    %165 = vector.broadcast %cst_57 : f32 to vector<8x1xf32>
    %166 = arith.subf %164, %165 : vector<8x1xf32>
    %167 = arith.subf %134, %137 : vector<8x1xf32>
    %cst_58 = arith.constant -1.000000e+00 : f32
    %168 = vector.broadcast %cst_58 : f32 to vector<8x1xf32>
    %169 = arith.mulf %168, %167 : vector<8x1xf32>
    %170 = arith.divf %169, %166 : vector<8x1xf32>
    %171 = arith.mulf %143, %160 : vector<8x1xf32>
    %172 = arith.addf %170, %171 : vector<8x1xf32>
    %cst_59 = arith.constant -1.000000e+00 : f32
    %173 = vector.broadcast %cst_59 : f32 to vector<8x1xf32>
    %174 = arith.mulf %173, %172 : vector<8x1xf32>
    %175 = arith.addf %174, %156 : vector<8x1xf32>
    %cst_60 = arith.constant 4.000000e+02 : f32
    %176 = vector.broadcast %cst_60 : f32 to vector<8x1xf32>
    %177 = arith.divf %172, %176 : vector<8x1xf32>
    %cst_61 = arith.constant 1.110000e+03 : f32
    %178 = vector.broadcast %cst_61 : f32 to vector<8x1xf32>
    %179 = arith.divf %175, %178 : vector<8x1xf32>
    %cst_62 = arith.constant 7.000000e+01 : f32
    %180 = vector.broadcast %cst_62 : f32 to vector<8x1xf32>
    %181 = arith.subf %134, %180 : vector<8x1xf32>
    %cst_63 = arith.constant 1.838000e-01 : f32
    %182 = vector.broadcast %cst_63 : f32 to vector<8x1xf32>
    %183 = arith.mulf %182, %181 : vector<8x1xf32>
    %cst_64 = arith.constant 0.000000e+00 : f32
    %184 = vector.broadcast %cst_64 : f32 to vector<8x1xf32>
    %185 = arith.subf %184, %183 : vector<8x1xf32>
    %186 = math.exp %185 : vector<8x1xf32>
    %cst_65 = arith.constant 1.000000e+00 : f32
    %187 = vector.broadcast %cst_65 : f32 to vector<8x1xf32>
    %188 = arith.addf %187, %186 : vector<8x1xf32>
    %cst_66 = arith.constant 1.000000e+00 : f32
    %189 = vector.broadcast %cst_66 : f32 to vector<8x1xf32>
    %190 = arith.divf %189, %188 : vector<8x1xf32>
    %cst_67 = arith.constant 1.000000e+00 : f32
    %191 = vector.broadcast %cst_67 : f32 to vector<8x1xf32>
    %192 = arith.subf %191, %190 : vector<8x1xf32>
    %193 = arith.subf %192, %140 : vector<8x1xf32>
    %cst_68 = arith.constant 2.000000e+01 : f32
    %194 = vector.broadcast %cst_68 : f32 to vector<8x1xf32>
    %195 = arith.divf %193, %194 : vector<8x1xf32>
    %cst_69 = arith.constant 1.000000e-03 : f32
    %196 = vector.broadcast %cst_69 : f32 to vector<8x1xf32>
    %197 = arith.mulf %156, %196 : vector<8x1xf32>
    %cst_70 = arith.constant 0.000000e+00 : f32
    %198 = vector.broadcast %cst_70 : f32 to vector<8x1xf32>
    %199 = vector.broadcast %6 : f32 to vector<8x1xf32>
    %200 = arith.mulf %199, %177 : vector<8x1xf32>
    %201 = arith.addf %8, %200 : vector<8x1xf32>
    %202 = vector.broadcast %6 : f32 to vector<8x1xf32>
    %203 = arith.mulf %202, %179 : vector<8x1xf32>
    %204 = arith.addf %9, %203 : vector<8x1xf32>
    %205 = vector.broadcast %6 : f32 to vector<8x1xf32>
    %206 = arith.mulf %205, %195 : vector<8x1xf32>
    %207 = arith.addf %10, %206 : vector<8x1xf32>
    %208 = vector.broadcast %6 : f32 to vector<8x1xf32>
    %209 = arith.mulf %208, %197 : vector<8x1xf32>
    %210 = arith.addf %11, %209 : vector<8x1xf32>
    %211 = vector.broadcast %6 : f32 to vector<8x1xf32>
    %212 = arith.mulf %211, %198 : vector<8x1xf32>
    %213 = arith.addf %12, %212 : vector<8x1xf32>
    %214 = arith.addf %4, %6 : f32
    %cst_71 = arith.constant 5.000000e+00 : f32
    %215 = arith.subf %214, %cst_71 : f32
    %cst_72 = arith.constant 5.000000e+00 : f32
    %216 = arith.divf %215, %cst_72 : f32
    %217 = arith.mulf %216, %216 : f32
    %cst_73 = arith.constant 0.000000e+00 : f32
    %218 = arith.subf %cst_73, %217 : f32
    %219 = math.exp %218 : f32
    %cst_74 = arith.constant 5.000000e+00 : f32
    %220 = arith.mulf %cst_74, %219 : f32
    %221 = vector.broadcast %220 : f32 to vector<8x1xf32>
    %222 = arith.mulf %221, %213 : vector<8x1xf32>
    %cst_75 = arith.constant 2.33333325 : f32
    %223 = vector.broadcast %cst_75 : f32 to vector<8x1xf32>
    %224 = arith.mulf %207, %223 : vector<8x1xf32>
    %cst_76 = arith.constant 0.666666686 : f32
    %225 = vector.broadcast %cst_76 : f32 to vector<8x1xf32>
    %226 = arith.addf %224, %225 : vector<8x1xf32>
    %cst_77 = arith.constant 1.600500e+00 : f32
    %227 = vector.broadcast %cst_77 : f32 to vector<8x1xf32>
    %228 = arith.mulf %207, %227 : vector<8x1xf32>
    %cst_78 = arith.constant 5.335000e-01 : f32
    %229 = vector.broadcast %cst_78 : f32 to vector<8x1xf32>
    %230 = arith.addf %228, %229 : vector<8x1xf32>
    %cst_79 = arith.constant 0.000000e+00 : f32
    %231 = vector.broadcast %cst_79 : f32 to vector<8x1xf32>
    %232 = arith.subf %230, %231 : vector<8x1xf32>
    %233 = arith.subf %201, %204 : vector<8x1xf32>
    %cst_80 = arith.constant -1.000000e+00 : f32
    %234 = vector.broadcast %cst_80 : f32 to vector<8x1xf32>
    %235 = arith.mulf %234, %233 : vector<8x1xf32>
    %236 = arith.divf %235, %232 : vector<8x1xf32>
    %237 = arith.mulf %210, %226 : vector<8x1xf32>
    %238 = arith.addf %236, %237 : vector<8x1xf32>
    %cst_81 = arith.constant -1.000000e+00 : f32
    %239 = vector.broadcast %cst_81 : f32 to vector<8x1xf32>
    %240 = arith.mulf %239, %238 : vector<8x1xf32>
    %241 = arith.addf %240, %222 : vector<8x1xf32>
    %cst_82 = arith.constant 4.000000e+02 : f32
    %242 = vector.broadcast %cst_82 : f32 to vector<8x1xf32>
    %243 = arith.divf %238, %242 : vector<8x1xf32>
    %cst_83 = arith.constant 1.110000e+03 : f32
    %244 = vector.broadcast %cst_83 : f32 to vector<8x1xf32>
    %245 = arith.divf %241, %244 : vector<8x1xf32>
    %cst_84 = arith.constant 7.000000e+01 : f32
    %246 = vector.broadcast %cst_84 : f32 to vector<8x1xf32>
    %247 = arith.subf %201, %246 : vector<8x1xf32>
    %cst_85 = arith.constant 1.838000e-01 : f32
    %248 = vector.broadcast %cst_85 : f32 to vector<8x1xf32>
    %249 = arith.mulf %248, %247 : vector<8x1xf32>
    %cst_86 = arith.constant 0.000000e+00 : f32
    %250 = vector.broadcast %cst_86 : f32 to vector<8x1xf32>
    %251 = arith.subf %250, %249 : vector<8x1xf32>
    %252 = math.exp %251 : vector<8x1xf32>
    %cst_87 = arith.constant 1.000000e+00 : f32
    %253 = vector.broadcast %cst_87 : f32 to vector<8x1xf32>
    %254 = arith.addf %253, %252 : vector<8x1xf32>
    %cst_88 = arith.constant 1.000000e+00 : f32
    %255 = vector.broadcast %cst_88 : f32 to vector<8x1xf32>
    %256 = arith.divf %255, %254 : vector<8x1xf32>
    %cst_89 = arith.constant 1.000000e+00 : f32
    %257 = vector.broadcast %cst_89 : f32 to vector<8x1xf32>
    %258 = arith.subf %257, %256 : vector<8x1xf32>
    %259 = arith.subf %258, %207 : vector<8x1xf32>
    %cst_90 = arith.constant 2.000000e+01 : f32
    %260 = vector.broadcast %cst_90 : f32 to vector<8x1xf32>
    %261 = arith.divf %259, %260 : vector<8x1xf32>
    %cst_91 = arith.constant 1.000000e-03 : f32
    %262 = vector.broadcast %cst_91 : f32 to vector<8x1xf32>
    %263 = arith.mulf %222, %262 : vector<8x1xf32>
    %cst_92 = arith.constant 0.000000e+00 : f32
    %264 = vector.broadcast %cst_92 : f32 to vector<8x1xf32>
    %cst_93 = arith.constant 6.000000e+00 : f32
    %265 = arith.divf %6, %cst_93 : f32
    %cst_94 = arith.constant 2.000000e+00 : f32
    %266 = vector.broadcast %cst_94 : f32 to vector<8x1xf32>
    %267 = arith.mulf %266, %109 : vector<8x1xf32>
    %268 = arith.addf %41, %267 : vector<8x1xf32>
    %cst_95 = arith.constant 2.000000e+00 : f32
    %269 = vector.broadcast %cst_95 : f32 to vector<8x1xf32>
    %270 = arith.mulf %269, %177 : vector<8x1xf32>
    %271 = arith.addf %268, %270 : vector<8x1xf32>
    %272 = arith.addf %271, %243 : vector<8x1xf32>
    %273 = vector.broadcast %265 : f32 to vector<8x1xf32>
    %274 = arith.mulf %273, %272 : vector<8x1xf32>
    %275 = arith.addf %8, %274 : vector<8x1xf32>
    %c0_96 = arith.constant 0 : index
    %c0_97 = arith.constant 0 : index
    %276 = vector.load %arg5[%c0_96, %c0_97] : memref<8x5xf32, #tpu.memory_space<vmem>>, vector<8x1xf32>
    tpu.vector_store %arg5[%c0_96, %c0_97], %275 {strides = array<i32>} : memref<8x5xf32, #tpu.memory_space<vmem>>, vector<8x1xf32>,
    %cst_98 = arith.constant 6.000000e+00 : f32
    %277 = arith.divf %6, %cst_98 : f32
    %cst_99 = arith.constant 2.000000e+00 : f32
    %278 = vector.broadcast %cst_99 : f32 to vector<8x1xf32>
    %279 = arith.mulf %278, %111 : vector<8x1xf32>
    %280 = arith.addf %43, %279 : vector<8x1xf32>
    %cst_100 = arith.constant 2.000000e+00 : f32
    %281 = vector.broadcast %cst_100 : f32 to vector<8x1xf32>
    %282 = arith.mulf %281, %179 : vector<8x1xf32>
    %283 = arith.addf %280, %282 : vector<8x1xf32>
    %284 = arith.addf %283, %245 : vector<8x1xf32>
    %285 = vector.broadcast %277 : f32 to vector<8x1xf32>
    %286 = arith.mulf %285, %284 : vector<8x1xf32>
    %287 = arith.addf %9, %286 : vector<8x1xf32>
    %c0_101 = arith.constant 0 : index
    %c1 = arith.constant 1 : index
    %288 = vector.load %arg5[%c0_101, %c1] : memref<8x5xf32, #tpu.memory_space<vmem>>, vector<8x1xf32>
    tpu.vector_store %arg5[%c0_101, %c1], %287 {strides = array<i32>} : memref<8x5xf32, #tpu.memory_space<vmem>>, vector<8x1xf32>,
    %cst_102 = arith.constant 6.000000e+00 : f32
    %289 = arith.divf %6, %cst_102 : f32
    %cst_103 = arith.constant 2.000000e+00 : f32
    %290 = vector.broadcast %cst_103 : f32 to vector<8x1xf32>
    %291 = arith.mulf %290, %127 : vector<8x1xf32>
    %292 = arith.addf %59, %291 : vector<8x1xf32>
    %cst_104 = arith.constant 2.000000e+00 : f32
    %293 = vector.broadcast %cst_104 : f32 to vector<8x1xf32>
    %294 = arith.mulf %293, %195 : vector<8x1xf32>
    %295 = arith.addf %292, %294 : vector<8x1xf32>
    %296 = arith.addf %295, %261 : vector<8x1xf32>
    %297 = vector.broadcast %289 : f32 to vector<8x1xf32>
    %298 = arith.mulf %297, %296 : vector<8x1xf32>
    %299 = arith.addf %10, %298 : vector<8x1xf32>
    %c0_105 = arith.constant 0 : index
    %c2 = arith.constant 2 : index
    %300 = vector.load %arg5[%c0_105, %c2] : memref<8x5xf32, #tpu.memory_space<vmem>>, vector<8x1xf32>
    tpu.vector_store %arg5[%c0_105, %c2], %299 {strides = array<i32>} : memref<8x5xf32, #tpu.memory_space<vmem>>, vector<8x1xf32>,
    %cst_106 = arith.constant 6.000000e+00 : f32
    %301 = arith.divf %6, %cst_106 : f32
    %cst_107 = arith.constant 2.000000e+00 : f32
    %302 = vector.broadcast %cst_107 : f32 to vector<8x1xf32>
    %303 = arith.mulf %302, %129 : vector<8x1xf32>
    %304 = arith.addf %61, %303 : vector<8x1xf32>
    %cst_108 = arith.constant 2.000000e+00 : f32
    %305 = vector.broadcast %cst_108 : f32 to vector<8x1xf32>
    %306 = arith.mulf %305, %197 : vector<8x1xf32>
    %307 = arith.addf %304, %306 : vector<8x1xf32>
    %308 = arith.addf %307, %263 : vector<8x1xf32>
    %309 = vector.broadcast %301 : f32 to vector<8x1xf32>
    %310 = arith.mulf %309, %308 : vector<8x1xf32>
    %311 = arith.addf %11, %310 : vector<8x1xf32>
    %c0_109 = arith.constant 0 : index
    %c3 = arith.constant 3 : index
    %312 = vector.load %arg5[%c0_109, %c3] : memref<8x5xf32, #tpu.memory_space<vmem>>, vector<8x1xf32>
    tpu.vector_store %arg5[%c0_109, %c3], %311 {strides = array<i32>} : memref<8x5xf32, #tpu.memory_space<vmem>>, vector<8x1xf32>,
    %cst_110 = arith.constant 6.000000e+00 : f32
    %313 = arith.divf %6, %cst_110 : f32
    %cst_111 = arith.constant 2.000000e+00 : f32
    %314 = vector.broadcast %cst_111 : f32 to vector<8x1xf32>
    %315 = arith.mulf %314, %130 : vector<8x1xf32>
    %316 = arith.addf %62, %315 : vector<8x1xf32>
    %cst_112 = arith.constant 2.000000e+00 : f32
    %317 = vector.broadcast %cst_112 : f32 to vector<8x1xf32>
    %318 = arith.mulf %317, %198 : vector<8x1xf32>
    %319 = arith.addf %316, %318 : vector<8x1xf32>
    %320 = arith.addf %319, %264 : vector<8x1xf32>
    %321 = vector.broadcast %313 : f32 to vector<8x1xf32>
    %322 = arith.mulf %321, %320 : vector<8x1xf32>
    %323 = arith.addf %12, %322 : vector<8x1xf32>
    %c0_113 = arith.constant 0 : index
    %c4 = arith.constant 4 : index
    %324 = vector.load %arg5[%c0_113, %c4] : memref<8x5xf32, #tpu.memory_space<vmem>>, vector<8x1xf32>
    tpu.vector_store %arg5[%c0_113, %c4], %323 {strides = array<i32>} : memref<8x5xf32, #tpu.memory_space<vmem>>, vector<8x1xf32>,
    %c0_114 = arith.constant 0 : index
    %c0_115 = arith.constant 0 : index
    %325 = vector.load %arg5[%c0_114, %c0_115] : memref<8x5xf32, #tpu.memory_space<vmem>>, vector<8x5xf32>
    %c0_116 = arith.constant 0 : index
    %c0_117 = arith.constant 0 : index
    %c0_118 = arith.constant 0 : index
    %326 = vector.load %arg4[%c0_116, %c0_117, %c0_118] : memref<1x8x5xf32, #tpu.memory_space<vmem>>, vector<1x8x5xf32>
    %327 = vector.shape_cast %326 : vector<1x8x5xf32> to vector<8x5xf32>
    %328 = vector.shape_cast %325 : vector<8x5xf32> to vector<1x8x5xf32>
    tpu.vector_store %arg4[%c0_116, %c0_117, %c0_118], %328 {strides = array<i32>} : memref<1x8x5xf32, #tpu.memory_space<vmem>>, vector<1x8x5xf32>,
    return
  }
  func.func @transform_0(%arg0: i32) -> i32 {
    %c0_i32 = arith.constant 0 : i32
    %c0_i32_0 = arith.constant 0 : i32
    return %c0_i32 : i32
  }
  func.func @transform_1(%arg0: i32) -> i32 {
    %c0_i32 = arith.constant 0 : i32
    %c0_i32_0 = arith.constant 0 : i32
    return %c0_i32 : i32
  }
  func.func @transform_2(%arg0: i32) -> (i32, i32) {
    %c0_i32 = arith.constant 0 : i32
    %c0_i32_0 = arith.constant 0 : i32
    %c0_i32_1 = arith.constant 0 : i32
    return %c0_i32, %c0_i32_0 : i32, i32
  }
  func.func @transform_3(%arg0: i32) -> (i32, i32, i32) {
    %c0_i32 = arith.constant 0 : i32
    %c0_i32_0 = arith.constant 0 : i32
    %c0_i32_1 = arith.constant 0 : i32
    return %arg0, %c0_i32, %c0_i32_0 : i32, i32, i32
  }
}

</mosaic_0001>

<llo_original>
// kernel: tpu_custom_call.1
$region0: #{tpu_custom_call.1}
  #allocation0 [shape = 'u32[]', space=smem, size = 0x4, offset = 0x4, fixed_abs, tag = 'smem constant byte address 0x4 - core index']
  #allocation1 [shape = 'u32[144,128]{1,0:T(1,128)}', space=vmem, size = 0x12000, scoped, tag = 'internal scratch']
  #allocation2 [shape = 'f32[8,5]{1,0:T(8,128)}', space=vmem, size = 0x1000, scoped, tag = 'scratch operand']
  %s0 = inlined_call_operand.hbm [shape: f32[7], index: 0, kind: input, shape index: {}]
  %s1 = inlined_call_operand.vmem [shape: f32[7], index: 1, kind: input, shape index: {}]
  %s2 = inlined_call_operand.hbm [shape: f32[8,5], index: 2, kind: input, shape index: {}]
  %s3 = inlined_call_operand.vmem [shape: f32[7,8,5], index: 3, kind: output, shape index: {}]
  %s4 = sld [smem:[#allocation0]]
  $region61: #{tpu_custom_call.1} parent=0
    _
  %s6 = ssub.s32 1, %s4
  %s7 = scalar_select 0, %s6, %s4
  $region1: #{tpu_custom_call.1} parent=0
    #allocation3 [shape = 'u8[512]{0}', space=smem, size = 0x200, scoped, tag = 'input window, operand 0, single buffered']
    #allocation4 [shape = 's32[2]{0}', space=sflag, size = 0x8, scoped, tag = 'scoped memory for tpu_custom_call.1']
    #allocation5 [shape = 's32[2]{0}', space=sflag, size = 0x8, scoped, tag = 'scoped memory for tpu_custom_call.1']
    #allocation6 [shape = 's32[2]{0}', space=sflag, size = 0x8, scoped, tag = 'scoped memory for tpu_custom_call.1']
    #allocation7 [shape = 'u8[512]{0}', space=smem, size = 0x200, scoped, tag = 'input window, operand 1, single buffered']
    #allocation8 [shape = 'u8[4096]{0}', space=vmem, size = 0x1000, scoped, tag = 'input window, operand 2, single buffered']
    %8 = vsyncpa [#allocation5], 0
    %9 = vsyncpa [#allocation6], 0
    %10 = vsyncpa [#allocation4], 0
    loop: start=0, step=1, limit=9
    $region2: #{tpu_custom_call.1} parent=1 // loop_pre_header
      _
    $region3: #{tpu_custom_call.1} parent=1 // loop_header
      %s12 = sphi 0, %s16
      %p13 = scmp.ge.s32.totalorder %s12, 9
      %s20 = sphi 0, %s20
      %s22 = sphi 0, %s20
      %s23 = sphi 0, %s22
      %s37 = sphi 0, %s23
      %s41 = sphi 0, %s41
      %s43 = sphi 0, %s41
      %s44 = sphi 0, %s43
      %s58 = sphi 0, %s44
      %s62 = sphi 0, %s62
      %s64 = sphi 0, %s62
      %s65 = sphi 0, %s64
      %s79 = sphi 0, %s65
      %s85 = sphi 0, %s87
      %s88 = sphi 0, %s85
      %s89 = sphi 0, %s88
      %s105 = sphi 0, %s89
    $region4: #{tpu_custom_call.1} parent=1 // loop_header_branch
      %15 = sbr.rel (%p13) target = $region8
    $region5: #{tpu_custom_call.1} parent=1 // loop_body
      %s17 = ssub.s32 %s12, 1
      %s18 = ssub.s32 %s12, 2
      %s19 = sadd.s32 %s12, 1
      %s21 = sadd.s32 %s20, 1
      %p24 = scmp.eq.s32.totalorder %s12, 6
      %p25 = scmp.ne.s32.totalorder %s20, %s22
      %p26 = scmp.eq.s32.totalorder %s12, 0
      %p27 = por %p25, %p26
      %p28 = scmp.ne.s32.totalorder %s20, %s22
      %p29 = scmp.eq.s32.totalorder %s17, 6
      %p30 = por %p28, %p29
      %p31 = scmp.ne.s32.totalorder %s22, %s23
      %p32 = scmp.eq.s32.totalorder %s17, 0
      %p33 = por %p31, %p32
      %p34 = scmp.ne.s32.totalorder %s22, %s23
      %p35 = scmp.eq.s32.totalorder %s18, 6
      %p36 = por %p34, %p35
      %p38 = scmp.ne.s32.totalorder %s23, %s37
      %p39 = scmp.eq.s32.totalorder %s18, 0
      %p40 = por %p38, %p39
      %s42 = sadd.s32 %s41, 1
      %p45 = scmp.eq.s32.totalorder %s12, 6
      %p46 = scmp.ne.s32.totalorder %s41, %s43
      %p47 = scmp.eq.s32.totalorder %s12, 0
      %p48 = por %p46, %p47
      %p49 = scmp.ne.s32.totalorder %s41, %s43
      %p50 = scmp.eq.s32.totalorder %s17, 6
      %p51 = por %p49, %p50
      %p52 = scmp.ne.s32.totalorder %s43, %s44
      %p53 = scmp.eq.s32.totalorder %s17, 0
      %p54 = por %p52, %p53
      %p55 = scmp.ne.s32.totalorder %s43, %s44
      %p56 = scmp.eq.s32.totalorder %s18, 6
      %p57 = por %p55, %p56
      %p59 = scmp.ne.s32.totalorder %s44, %s58
      %p60 = scmp.eq.s32.totalorder %s18, 0
      %p61 = por %p59, %p60
      %s63 = sadd.s32 %s62, 1
      %p66 = scmp.eq.s32.totalorder %s12, 6
      %p67 = scmp.ne.s32.totalorder %s62, %s64
      %p68 = scmp.eq.s32.totalorder %s12, 0
      %p69 = por %p67, %p68
      %p70 = scmp.ne.s32.totalorder %s62, %s64
      %p71 = scmp.eq.s32.totalorder %s17, 6
      %p72 = por %p70, %p71
      %p73 = scmp.ne.s32.totalorder %s64, %s65
      %p74 = scmp.eq.s32.totalorder %s17, 0
      %p75 = por %p73, %p74
      %p76 = scmp.ne.s32.totalorder %s64, %s65
      %p77 = scmp.eq.s32.totalorder %s18, 6
      %p78 = por %p76, %p77
      %p80 = scmp.ne.s32.totalorder %s65, %s79
      %p81 = scmp.eq.s32.totalorder %s18, 0
      %p82 = por %p80, %p81
      %s83 = ssub.s32 %s12, %s19
      %p84 = scmp.eq.s32.totalorder %s83, 0
      %s86 = sadd.s32 %s85, 1
      %s87 = scalar_select %p84, %s85, %s86
      %p90 = pneg %p84
      %p91 = scmp.eq.s32.totalorder %s12, 6
      %p92 = por %p90, %p91
      %p93 = scmp.ne.s32.totalorder %s85, %s88
      %p94 = scmp.eq.s32.totalorder %s12, 0
      %p95 = por %p93, %p94
      %p96 = scmp.ne.s32.totalorder %s85, %s88
      %p97 = scmp.eq.s32.totalorder %s17, 6
      %p98 = por %p96, %p97
      %p99 = scmp.ne.s32.totalorder %s88, %s89
      %p100 = scmp.eq.s32.totalorder %s17, 0
      %p101 = por %p99, %p100
      %p102 = scmp.ne.s32.totalorder %s88, %s89
      %p103 = scmp.eq.s32.totalorder %s18, 6
      %p104 = por %p102, %p103
      %p106 = scmp.ne.s32.totalorder %s89, %s105
      %p107 = scmp.eq.s32.totalorder %s18, 0
      %p108 = por %p106, %p107
      %p109 = scmp.le.s32.totalorder 1, %s12
      %p110 = scmp.lt.s32.totalorder %s12, 8
      %p111 = pnand %p109, %p110
      %p112 = pneg %p111
      // Predicated region
      $region9: #{tpu_custom_call.1} parent=5 // pred_check
        _
      $region10: #{tpu_custom_call.1} parent=5 // pred_check_branch
        %114 = sbr.rel (%p111) target = $region12
      $region11: #{tpu_custom_call.1} parent=5 // pred_region
        %s115 = ssub.s32 %s12, 1
        // Predicated region
        $region13: #{tpu_custom_call.1} parent=11 // pred_check
          %p116 = pneg %p33
        $region14: #{tpu_custom_call.1} parent=11 // pred_check_branch
          %118 = sbr.rel (%p116) target = $region16
        $region15: #{tpu_custom_call.1} parent=11 // pred_region
          %s120 = ssub.s32 16, 16
          %121 = vsyncadd [#allocation5], %s120
          %124 = dma.hbm_to_smem %s0, 16, [#allocation3], [#allocation5]
        $region16: #{tpu_custom_call.1} parent=11 // pred_fallthru
          _
        // Predicated region
        $region17: #{tpu_custom_call.1} parent=11 // pred_check
          %p125 = pneg %p54
        $region18: #{tpu_custom_call.1} parent=11 // pred_check_branch
          %127 = sbr.rel (%p125) target = $region20
        $region19: #{tpu_custom_call.1} parent=11 // pred_region
          %s129 = ssub.s32 16, 16
          %130 = vsyncadd [#allocation6], %s129
          %s132 = sshll.u32 %s1, 4
          %s133 = int_to_ptr.vmem [resolvable:$true] %s132
          %135 = dma.vmem_to_smem %s133, 16, [#allocation7], [#allocation6]
        $region20: #{tpu_custom_call.1} parent=11 // pred_fallthru
          _
        // Predicated region
        $region21: #{tpu_custom_call.1} parent=11 // pred_check
          %p136 = pneg %p75
        $region22: #{tpu_custom_call.1} parent=11 // pred_check_branch
          %138 = sbr.rel (%p136) target = $region24
        $region23: #{tpu_custom_call.1} parent=11 // pred_region
          %s140 = ssub.s32 128, 128
          %141 = vsyncadd [#allocation4], %s140
          %s143 = sshll.u32 [#allocation8], 4
          %s144 = int_to_ptr.vmem [resolvable:$true] %s143
          %146 = dma.hbm_to_vmem [thread:$0]  %s2, 128, %s144, [#allocation4]
        $region24: #{tpu_custom_call.1} parent=11 // pred_fallthru
          _
      $region12: #{tpu_custom_call.1} parent=5 // pred_fallthru
        _
      %p147 = scmp.lt.s32.totalorder %s12, 7
      // Predicated region
      $region25: #{tpu_custom_call.1} parent=5 // pred_check
        %p148 = pneg %p147
      $region26: #{tpu_custom_call.1} parent=5 // pred_check_branch
        %150 = sbr.rel (%p148) target = $region28
      $region27: #{tpu_custom_call.1} parent=5 // pred_region
        _
      $region28: #{tpu_custom_call.1} parent=5 // pred_fallthru
        _
      %p151 = scmp.le.s32.totalorder 1, %s12
      %p152 = scmp.lt.s32.totalorder %s12, 8
      %p153 = pnand %p151, %p152
      %p154 = pneg %p153
      // Predicated region
      $region29: #{tpu_custom_call.1} parent=5 // pred_check
        _
      $region30: #{tpu_custom_call.1} parent=5 // pred_check_branch
        %156 = sbr.rel (%p153) target = $region32
      $region31: #{tpu_custom_call.1} parent=5 // pred_region
        %s157 = ssub.s32 %s12, 1
        // Predicated region
        $region33: #{tpu_custom_call.1} parent=31 // pred_check
          %p158 = pneg %p33
        $region34: #{tpu_custom_call.1} parent=31 // pred_check_branch
          %160 = sbr.rel (%p158) target = $region36
        $region35: #{tpu_custom_call.1} parent=31 // pred_region
          %161 = dma.done [#allocation5], 16
        $region36: #{tpu_custom_call.1} parent=31 // pred_fallthru
          _
        // Predicated region
        $region37: #{tpu_custom_call.1} parent=31 // pred_check
          %p162 = pneg %p54
        $region38: #{tpu_custom_call.1} parent=31 // pred_check_branch
          %164 = sbr.rel (%p162) target = $region40
        $region39: #{tpu_custom_call.1} parent=31 // pred_region
          %165 = dma.done [#allocation6], 16
        $region40: #{tpu_custom_call.1} parent=31 // pred_fallthru
          _
        // Predicated region
        $region41: #{tpu_custom_call.1} parent=31 // pred_check
          %p166 = pneg %p75
        $region42: #{tpu_custom_call.1} parent=31 // pred_check_branch
          %168 = sbr.rel (%p166) target = $region44
        $region43: #{tpu_custom_call.1} parent=31 // pred_region
          %169 = dma.done [#allocation4], 128
        $region44: #{tpu_custom_call.1} parent=31 // pred_fallthru
          _
        %170 = sfence
        %p171 = pneg %p33
        %p172 = pneg %p30
        %p173 = pneg %p54
        %p174 = pneg %p51
        %p175 = pneg %p75
        %p176 = pneg %p72
        %p177 = pneg %p101
        %p178 = pneg %p98
        %p179 = scmp.lt.s32.totalorder %s17, 6
        %s180 = scalar_select %p179, %s17, 6
        %s181 = smul.addr %s180, 8
        %s182 = scalar_lea.vmem %s3, %s181
        %p183 = scmp.lt.s32.totalorder %s17, 6
        %s184 = scalar_select %p183, %s17, 6
        %s185 = smul.addr %s184, 8
        %s186 = scalar_lea.vmem %s3, %s185
        %p187 = scmp.eq.s32.totalorder %s17, 0
        // Predicated region
        $region45: #{tpu_custom_call.1} parent=31 // pred_check
          %p188 = pneg %p187
        $region46: #{tpu_custom_call.1} parent=31 // pred_check_branch
          %190 = sbr.rel (%p188) target = $region48
        $region47: #{tpu_custom_call.1} parent=31 // pred_region
          %v191 = vld [vmem:[#allocation8] sm:$0xff]
          %vm192 = vcmask 39936
          %193 = vst.msk [vmem:[#allocation2] sm:$0xff] %vm192, %v191
        $region48: #{tpu_custom_call.1} parent=31 // pred_fallthru
          _
        %s194 = sld [smem:[#allocation3 + %s17]]
        %s195 = sld [smem:[#allocation7 + %s17]]
        %v196 = vld [vmem:[#allocation2] sm:$0xff]
        %s197 = ssub.f32 %s194, 5.0
        %v198 = vrcp.pop 5.0
        %s199 = vtos %v198
        %s200 = smul.f32 %s197, %s199
        %s201 = smul.f32 %s200, %s200
        %s202 = ssub.f32 0.0, %s201
        %v203 = vstv %s202
        %v204 = vmul.f32 %v203, 1.442695
        %v205 = vpow.pop %v204
        %s206 = vtos %v205
        %s207 = smul.f32 %s206, 5.0
        %v208 = vstv %s207
        %v209 = vmul.f32 %v208, %v196
        %v210 = vmul.f32 %v196, 2.3333333
        %v211 = vadd.f32 %v210, 0.6666667
        %v212 = vmul.f32 %v196, 1.6005
        %v213 = vadd.f32 %v212, 0.5335
        %215 = vrot.lane.b32.xlu0 %v196, 127
        %v216 = vpop.permute.xlu0 %215
        %v218 = vsub.f32 %v196, %v216
        %v219 = vmul.f32 %v218, -1.0
        %221 = vrot.lane.b32.xlu0 %v213, 126
        %v222 = vpop.permute.xlu0 %221
        %v224 = vrcp.pop %v222
        %v225 = vmul.f32 %v219, %v224
        %227 = vrot.lane.b32.xlu0 %v211, 1
        %v228 = vpop.permute.xlu0 %227
        %v230 = vmul.f32 %v196, %v228
        %232 = vrot.lane.b32.xlu0 %v230, 125
        %v233 = vpop.permute.xlu0 %232
        %v235 = vadd.f32 %v225, %v233
        %v236 = vmul.f32 %v235, -1.0
        %238 = vrot.lane.b32.xlu0 %v209, 124
        %v239 = vpop.permute.xlu0 %238
        %v241 = vadd.f32 %v236, %v239
        %v242 = vrcp.pop 400.0
        %v243 = vmul.f32 %v235, %v242
        %v244 = vrcp.pop 1110.0
        %v245 = vmul.f32 %v241, %v244
        %v246 = vsub.f32 %v196, 70.0
        %v247 = vmul.f32 %v246, 0.1838
        %v248 = vsub.f32 0.0, %v247
        %v249 = vmul.f32 %v248, 1.442695
        %v250 = vpow.pop %v249
        %v251 = vadd.f32 %v250, 1.0
        %v252 = vrcp.pop %v251
        %v253 = vmul.f32 1.0, %v252
        %v254 = vsub.f32 1.0, %v253
        %255 = vrot.lane.b32.xlu0 %v196, 126
        %v256 = vpop.permute.xlu0 %255
        %v258 = vsub.f32 %v254, %v256
        %v259 = vrcp.pop 20.0
        %v260 = vmul.f32 %v258, %v259
        %v261 = vmul.f32 %v209, 0.001
        %s262 = smul.f32 %s195, 0.5
        %v263 = vstv %s262
        %v264 = vmul.f32 %v263, %v243
        %v265 = vadd.f32 %v196, %v264
        %v266 = vmul.f32 %v263, %v245
        %268 = vrot.lane.b32.xlu0 %v266, 1
        %v269 = vpop.permute.xlu0 %268
        %v271 = vadd.f32 %v196, %v269
        %v272 = vmul.f32 %v263, %v260
        %274 = vrot.lane.b32.xlu0 %v272, 2
        %v275 = vpop.permute.xlu0 %274
        %v277 = vadd.f32 %v196, %v275
        %v278 = vmul.f32 %v263, %v261
        %280 = vrot.lane.b32.xlu0 %v278, 127
        %v281 = vpop.permute.xlu0 %280
        %v283 = vadd.f32 %v196, %v281
        %v284 = vmul.f32 %v263, 0.0
        %v285 = vadd.f32 %v196, %v284
        %s286 = sadd.f32 %s194, %s262
        %s287 = ssub.f32 %s286, 5.0
        %v288 = vrcp.pop 5.0
        %s289 = vtos %v288
        %s290 = smul.f32 %s287, %s289
        %s291 = smul.f32 %s290, %s290
        %s292 = ssub.f32 0.0, %s291
        %v293 = vstv %s292
        %v294 = vmul.f32 %v293, 1.442695
        %v295 = vpow.pop %v294
        %s296 = vtos %v295
        %s297 = smul.f32 %s296, 5.0
        %v298 = vstv %s297
        %v299 = vmul.f32 %v298, %v285
        %v300 = vmul.f32 %v277, 2.3333333
        %v301 = vadd.f32 %v300, 0.6666667
        %v302 = vmul.f32 %v277, 1.6005
        %v303 = vadd.f32 %v302, 0.5335
        %305 = vrot.lane.b32.xlu0 %v271, 127
        %v306 = vpop.permute.xlu0 %305
        %v308 = vsub.f32 %v265, %v306
        %v309 = vmul.f32 %v308, -1.0
        %311 = vrot.lane.b32.xlu0 %v303, 126
        %v312 = vpop.permute.xlu0 %311
        %v314 = vrcp.pop %v312
        %v315 = vmul.f32 %v309, %v314
        %317 = vrot.lane.b32.xlu0 %v301, 1
        %v318 = vpop.permute.xlu0 %317
        %v320 = vmul.f32 %v283, %v318
        %322 = vrot.lane.b32.xlu0 %v320, 125
        %v323 = vpop.permute.xlu0 %322
        %v325 = vadd.f32 %v315, %v323
        %v326 = vmul.f32 %v325, -1.0
        %328 = vrot.lane.b32.xlu0 %v299, 124
        %v329 = vpop.permute.xlu0 %328
        %v331 = vadd.f32 %v326, %v329
        %v332 = vmul.f32 %v325, %v242
        %v333 = vmul.f32 %v331, %v244
        %v334 = vsub.f32 %v265, 70.0
        %v335 = vmul.f32 %v334, 0.1838
        %v336 = vsub.f32 0.0, %v335
        %v337 = vmul.f32 %v336, 1.442695
        %v338 = vpow.pop %v337
        %v339 = vadd.f32 %v338, 1.0
        %v340 = vrcp.pop %v339
        %v341 = vmul.f32 1.0, %v340
        %v342 = vsub.f32 1.0, %v341
        %344 = vrot.lane.b32.xlu0 %v277, 126
        %v345 = vpop.permute.xlu0 %344
        %v347 = vsub.f32 %v342, %v345
        %v348 = vmul.f32 %v347, %v259
        %v349 = vmul.f32 %v299, 0.001
        %v350 = vmul.f32 %v263, %v332
        %v351 = vadd.f32 %v196, %v350
        %v352 = vmul.f32 %v263, %v333
        %354 = vrot.lane.b32.xlu0 %v352, 1
        %v355 = vpop.permute.xlu0 %354
        %v357 = vadd.f32 %v196, %v355
        %v358 = vmul.f32 %v263, %v348
        %360 = vrot.lane.b32.xlu0 %v358, 2
        %v361 = vpop.permute.xlu0 %360
        %v363 = vadd.f32 %v196, %v361
        %v364 = vmul.f32 %v263, %v349
        %366 = vrot.lane.b32.xlu0 %v364, 127
        %v367 = vpop.permute.xlu0 %366
        %v369 = vadd.f32 %v196, %v367
        %v370 = vmul.f32 %v363, 2.3333333
        %v371 = vadd.f32 %v370, 0.6666667
        %v372 = vmul.f32 %v363, 1.6005
        %v373 = vadd.f32 %v372, 0.5335
        %375 = vrot.lane.b32.xlu0 %v357, 127
        %v376 = vpop.permute.xlu0 %375
        %v378 = vsub.f32 %v351, %v376
        %v379 = vmul.f32 %v378, -1.0
        %381 = vrot.lane.b32.xlu0 %v373, 126
        %v382 = vpop.permute.xlu0 %381
        %v384 = vrcp.pop %v382
        %v385 = vmul.f32 %v379, %v384
        %387 = vrot.lane.b32.xlu0 %v371, 1
        %v388 = vpop.permute.xlu0 %387
        %v390 = vmul.f32 %v369, %v388
        %392 = vrot.lane.b32.xlu0 %v390, 125
        %v393 = vpop.permute.xlu0 %392
        %v395 = vadd.f32 %v385, %v393
        %v396 = vmul.f32 %v395, -1.0
        %v397 = vadd.f32 %v396, %v329
        %v398 = vmul.f32 %v395, %v242
        %v399 = vmul.f32 %v397, %v244
        %v400 = vsub.f32 %v351, 70.0
        %v401 = vmul.f32 %v400, 0.1838
        %v402 = vsub.f32 0.0, %v401
        %v403 = vmul.f32 %v402, 1.442695
        %v404 = vpow.pop %v403
        %v405 = vadd.f32 %v404, 1.0
        %v406 = vrcp.pop %v405
        %v407 = vmul.f32 1.0, %v406
        %v408 = vsub.f32 1.0, %v407
        %410 = vrot.lane.b32.xlu0 %v363, 126
        %v411 = vpop.permute.xlu0 %410
        %v413 = vsub.f32 %v408, %v411
        %v414 = vmul.f32 %v413, %v259
        %v415 = vstv %s195
        %v416 = vmul.f32 %v415, %v398
        %v417 = vadd.f32 %v196, %v416
        %v418 = vmul.f32 %v415, %v399
        %420 = vrot.lane.b32.xlu0 %v418, 1
        %v421 = vpop.permute.xlu0 %420
        %v423 = vadd.f32 %v196, %v421
        %v424 = vmul.f32 %v415, %v414
        %426 = vrot.lane.b32.xlu0 %v424, 2
        %v427 = vpop.permute.xlu0 %426
        %v429 = vadd.f32 %v196, %v427
        %v430 = vmul.f32 %v415, %v349
        %432 = vrot.lane.b32.xlu0 %v430, 127
        %v433 = vpop.permute.xlu0 %432
        %v435 = vadd.f32 %v196, %v433
        %v436 = vmul.f32 %v415, 0.0
        %v437 = vadd.f32 %v196, %v436
        %s438 = sadd.f32 %s194, %s195
        %s439 = ssub.f32 %s438, 5.0
        %v440 = vrcp.pop 5.0
        %s441 = vtos %v440
        %s442 = smul.f32 %s439, %s441
        %s443 = smul.f32 %s442, %s442
        %s444 = ssub.f32 0.0, %s443
        %v445 = vstv %s444
        %v446 = vmul.f32 %v445, 1.442695
        %v447 = vpow.pop %v446
        %s448 = vtos %v447
        %s449 = smul.f32 %s448, 5.0
        %v450 = vstv %s449
        %v451 = vmul.f32 %v450, %v437
        %v452 = vmul.f32 %v429, 2.3333333
        %v453 = vadd.f32 %v452, 0.6666667
        %v454 = vmul.f32 %v429, 1.6005
        %v455 = vadd.f32 %v454, 0.5335
        %457 = vrot.lane.b32.xlu0 %v423, 127
        %v458 = vpop.permute.xlu0 %457
        %v460 = vsub.f32 %v417, %v458
        %v461 = vmul.f32 %v460, -1.0
        %463 = vrot.lane.b32.xlu0 %v455, 126
        %v464 = vpop.permute.xlu0 %463
        %v466 = vrcp.pop %v464
        %v467 = vmul.f32 %v461, %v466
        %469 = vrot.lane.b32.xlu0 %v453, 1
        %v470 = vpop.permute.xlu0 %469
        %v472 = vmul.f32 %v435, %v470
        %474 = vrot.lane.b32.xlu0 %v472, 125
        %v475 = vpop.permute.xlu0 %474
        %v477 = vadd.f32 %v467, %v475
        %v478 = vmul.f32 %v477, -1.0
        %480 = vrot.lane.b32.xlu0 %v451, 124
        %v481 = vpop.permute.xlu0 %480
        %v483 = vadd.f32 %v478, %v481
        %v484 = vmul.f32 %v477, %v242
        %v485 = vmul.f32 %v483, %v244
        %v486 = vsub.f32 %v417, 70.0
        %v487 = vmul.f32 %v486, 0.1838
        %v488 = vsub.f32 0.0, %v487
        %v489 = vmul.f32 %v488, 1.442695
        %v490 = vpow.pop %v489
        %v491 = vadd.f32 %v490, 1.0
        %v492 = vrcp.pop %v491
        %v493 = vmul.f32 1.0, %v492
        %v494 = vsub.f32 1.0, %v493
        %496 = vrot.lane.b32.xlu0 %v429, 126
        %v497 = vpop.permute.xlu0 %496
        %v499 = vsub.f32 %v494, %v497
        %v500 = vmul.f32 %v499, %v259
        %v501 = vmul.f32 %v451, 0.001
        %v502 = vrcp.pop 6.0
        %s503 = vtos %v502
        %s504 = smul.f32 %s195, %s503
        %v505 = vmul.f32 %v332, 2.0
        %v506 = vadd.f32 %v243, %v505
        %v507 = vmul.f32 %v398, 2.0
        %v508 = vadd.f32 %v506, %v507
        %v509 = vadd.f32 %v508, %v484
        %v510 = vstv %s504
        %v511 = vmul.f32 %v510, %v509
        %v512 = vadd.f32 %v196, %v511
        %vm513 = vcmask 7168
        %514 = vst.msk [vmem:[#allocation2] sm:$0xff] %vm513, %v512
        %v515 = vmul.f32 %v333, 2.0
        %v516 = vadd.f32 %v245, %v515
        %v517 = vmul.f32 %v399, 2.0
        %v518 = vadd.f32 %v516, %v517
        %v519 = vadd.f32 %v518, %v485
        %v520 = vmul.f32 %v510, %v519
        %522 = vrot.lane.b32.xlu0 %v520, 1
        %v523 = vpop.permute.xlu0 %522
        %v525 = vadd.f32 %v196, %v523
        %vm526 = vcmask 15368
        %527 = vst.msk [vmem:[#allocation2] sm:$0xff] %vm526, %v525
        %v528 = vmul.f32 %v348, 2.0
        %v529 = vadd.f32 %v260, %v528
        %v530 = vmul.f32 %v414, 2.0
        %v531 = vadd.f32 %v529, %v530
        %v532 = vadd.f32 %v531, %v500
        %v533 = vmul.f32 %v510, %v532
        %535 = vrot.lane.b32.xlu0 %v533, 2
        %v536 = vpop.permute.xlu0 %535
        %v538 = vadd.f32 %v196, %v536
        %vm539 = vcmask 23568
        %540 = vst.msk [vmem:[#allocation2] sm:$0xff] %vm539, %v538
        %v541 = vmul.f32 %v349, 2.0
        %v542 = vadd.f32 %v261, %v541
        %v543 = vadd.f32 %v542, %v541
        %v544 = vadd.f32 %v543, %v501
        %v545 = vmul.f32 %v510, %v544
        %547 = vrot.lane.b32.xlu0 %v545, 127
        %v548 = vpop.permute.xlu0 %547
        %v550 = vadd.f32 %v196, %v548
        %vm551 = vcmask 31768
        %552 = vst.msk [vmem:[#allocation2] sm:$0xff] %vm551, %v550
        %v553 = vmul.f32 %v510, 0.0
        %v554 = vadd.f32 %v196, %v553
        %vm555 = vcmask 39968
        %556 = vst.msk [vmem:[#allocation2] sm:$0xff] %vm555, %v554
        %v557 = vld [vmem:[#allocation2] sm:$0xff]
        %vm558 = vcmask 39936
        %559 = vst.msk [vmem:[%s186] sm:$0xff] %vm558, %v557
        %p560 = scmp.lt.s32.totalorder %s17, 6
        %s561 = scalar_select %p560, %s17, 6
        %s562 = smul.addr %s561, 8
        %s563 = scalar_lea.vmem %s3, %s562
        // Predicated region
        $region49: #{tpu_custom_call.1} parent=31 // pred_check
          %p564 = pneg %p98
        $region50: #{tpu_custom_call.1} parent=31 // pred_check_branch
          %566 = sbr.rel (%p564) target = $region52
        $region51: #{tpu_custom_call.1} parent=31 // pred_region
          _
        $region52: #{tpu_custom_call.1} parent=31 // pred_fallthru
          _
      $region32: #{tpu_custom_call.1} parent=5 // pred_fallthru
        _
      %p567 = scmp.le.s32.totalorder 2, %s12
      // Predicated region
      $region53: #{tpu_custom_call.1} parent=5 // pred_check
        %p568 = pneg %p567
      $region54: #{tpu_custom_call.1} parent=5 // pred_check_branch
        %570 = sbr.rel (%p568) target = $region56
      $region55: #{tpu_custom_call.1} parent=5 // pred_region
        %s571 = ssub.s32 %s12, 2
        // Predicated region
        $region57: #{tpu_custom_call.1} parent=55 // pred_check
          %p572 = pneg %p104
        $region58: #{tpu_custom_call.1} parent=55 // pred_check_branch
          %574 = sbr.rel (%p572) target = $region60
        $region59: #{tpu_custom_call.1} parent=55 // pred_region
          %p575 = scmp.lt.s32.totalorder %s18, 6
          %s576 = scalar_select %p575, %s18, 6
          %s577 = smul.addr %s576, 8
          %s578 = scalar_lea.vmem %s3, %s577
        $region60: #{tpu_custom_call.1} parent=55 // pred_fallthru
          _
      $region56: #{tpu_custom_call.1} parent=5 // pred_fallthru
        _
    $region6: #{tpu_custom_call.1} parent=1 // loop_footer
      %s16 = sadd.s32 1, %s12
    $region7: #{tpu_custom_call.1} parent=1 // loop_footer_branch
      %11 = sbr.rel target = $region3
    $region8: #{tpu_custom_call.1} parent=1 // loop_exit
      _
    %579 = vsyncpa [#allocation4], 1
    %s580 = scalar_lea.sflag [#allocation4], 1
    %581 = vsyncpa %s580, 1
    %582 = vsyncpa [#allocation5], 1
    %s583 = scalar_lea.sflag [#allocation5], 1
    %584 = vsyncpa %s583, 1
    %585 = vsyncpa [#allocation6], 1
    %s586 = scalar_lea.sflag [#allocation6], 1
    %587 = vsyncpa %s586, 1

</llo_original>
